<compile_context>
chip_gen: v7x
topology: tpu7x:2x2x1
jax: 0.10.0
libtpu: 0.0.40
codegen_flags: <defaults>
</compile_context>

<pallas_src>
import jax
import jax.numpy as jnp
from jax.experimental import pallas as pl
from jax.experimental.pallas import tpu as pltpu


def _round_up(v, m):
    return ((v + m - 1) // m) * m


def _softmax_logprob_amps_kernel(x_ref, mask_ref, o_ref):
    neg_inf = jnp.float32(-jnp.inf)
    finite_floor = jnp.float32(-jnp.finfo(jnp.float32).max)
    tiny = jnp.float32(jnp.finfo(jnp.float32).tiny)

    x = x_ref[...].astype(jnp.float32)        # (TB, N); upcast is free vs HBM bytes
    keep = mask_ref[...] != 0                 # caller's mask dtype, no wrapper convert

    # log-sum-exp of 2*x over kept entries, with the 2x folded inside the exp
    # as 2*(x - m) so no explicit 2*x can overflow f32.
    y = jnp.where(keep, x, neg_inf)           # the only select in the kernel
    m = jnp.max(y, axis=-1, keepdims=True)    # (TB, 1)
    m = jnp.maximum(m, finite_floor)          # fully-masked row: keep m finite
    denom = jnp.sum(jnp.exp(2.0 * (y - m)), axis=-1, keepdims=True)
    denom = jnp.maximum(denom, tiny)          # fully-masked row: log stays finite
    # 0.5 * log_softmax(2x) = x - m - 0.5*log(denom); masked: -inf - finite = -inf.
    out = y - (m + 0.5 * jnp.log(denom))
    o_ref[...] = out.astype(o_ref.dtype)


def softmax_log_prob_amps(x, mask, *, out_dtype=None, tb=None):
    """0.5 * log_softmax(2*x masked with -inf where mask==0, dim=1).

    x, mask: (B, N). Reduction is over the last axis, which maps onto the
    128-wide lane dimension. x and mask are consumed in the caller's dtypes;
    out_dtype defaults to x.dtype (bf16 in -> bf16 out).
    Fully-masked rows produce -inf (not NaN).
    """
    B, N = x.shape
    if out_dtype is None:
        out_dtype = x.dtype

    if tb is None:
        # ~3 MiB of x per input tile: amortizes the ~0.35 us/step pipeline
        # overhead while the double-buffered (x + mask + out) live set stays
        # far below v7x's 64 MiB VMEM.  Cap so the grid keeps >= ~4 steps when
        # B allows it (work for both v7x TensorCores + prefetch overlap).
        target_rows = max(32, (3 * 1024 * 1024) // (N * x.dtype.itemsize))
        cap_rows = max(32, _round_up(pl.cdiv(B, 4), 32))
        tb = min(target_rows, cap_rows)
    if tb >= B:
        tb = B                       # one block spanning the whole batch (full-dim case)
    else:
        tb = max(32, (tb // 32) * 32)  # (32,128) granularity: int8/bf16 native tiles

    # Double-buffered live tiles: 2 * tb * N * (x + mask + out) bytes, + headroom.
    bytes_per_row = N * (x.dtype.itemsize + mask.dtype.itemsize
                         + jnp.dtype(out_dtype).itemsize)
    live_bytes = 2 * tb * bytes_per_row
    vmem_limit = int(min(max(live_bytes + (8 << 20), 16 << 20), 48 << 20))

    grid = (pl.cdiv(B, tb),)  # ragged last block handled by Pallas (no host pad)
    return pl.pallas_call(
        _softmax_logprob_amps_kernel,
        out_shape=jax.ShapeDtypeStruct((B, N), out_dtype),
        grid=grid,
        in_specs=[
            pl.BlockSpec((tb, N), lambda i: (i, 0)),
            pl.BlockSpec((tb, N), lambda i: (i, 0)),
        ],
        out_specs=pl.BlockSpec((tb, N), lambda i: (i, 0)),
        compiler_params=pltpu.CompilerParams(
            dimension_semantics=("parallel",),
            vmem_limit_bytes=vmem_limit,
        ),
    )(x, mask)
    # TODO(synk): for very large N (tens of thousands+) add an N-tiled
    # online-softmax path (grid=(B_tiles, N_tiles), N axis "arbitrary",
    # m/denom accumulators in VMEM scratch); whole-row blocks win for N <~ 8K.


def _reference(x, mask):
    """Pure-JAX reference mirroring the PyTorch forward (valid rows only)."""
    x32 = x.astype(jnp.float32)
    x2 = jnp.where(mask > 0, 2.0 * x32, -jnp.inf)
    return 0.5 * jax.nn.log_softmax(x2, axis=1)


if __name__ == "__main__":
    key = jax.random.PRNGKey(0)
    k_x, k_m, k_x2, k_m2, k_x3, k_m3 = jax.random.split(key, 6)

    # --- Test 1: small shape aligned to the (8, 128) vreg tile, f32 ---------
    B, N = 8, 128
    x = jax.random.normal(k_x, (B, N), dtype=jnp.float32)
    mask = (jax.random.uniform(k_m, (B, N)) > 0.3).astype(jnp.int32)
    mask = mask.at[:, 0].set(1)  # at least one valid entry per row

    out = jax.block_until_ready(softmax_log_prob_amps(x, mask))
    ref = _reference(x, mask)

    valid = mask > 0
    diff = jnp.max(jnp.abs(jnp.where(valid, out - ref, 0.0)))
    assert diff < 1e-5, f"mismatch: {diff}"
    assert bool(jnp.all(jnp.where(valid, True, jnp.isneginf(out)))), \
        "masked entries not -inf"

    # --- Test 2: ragged B (not a multiple of 8/32) + a fully-masked row -----
    B2, N2 = 20, 128
    x2 = jax.random.normal(k_x2, (B2, N2), dtype=jnp.float32)
    mask2 = (jax.random.uniform(k_m2, (B2, N2)) > 0.3).astype(jnp.int32)
    mask2 = mask2.at[:, 0].set(1)
    mask2 = mask2.at[3, :].set(0)  # fully masked row -> expect all -inf, no NaN

    out2 = jax.block_until_ready(softmax_log_prob_amps(x2, mask2))
    ref2 = _reference(x2, mask2)

    rows_ok = jnp.arange(B2) != 3
    valid2 = (mask2 > 0) & rows_ok[:, None]
    diff2 = jnp.max(jnp.abs(jnp.where(valid2, out2 - ref2, 0.0)))
    assert diff2 < 1e-5, f"mismatch (test 2): {diff2}"
    assert bool(jnp.all(jnp.isneginf(out2[3]))), "fully-masked row not all -inf"
    assert not bool(jnp.any(jnp.isnan(out2))), "NaN in output"

    # --- Test 3: bf16 in -> bf16 out (caller-dtype path, no wrapper converts)
    B3, N3 = 16, 256
    x3 = jax.random.normal(k_x3, (B3, N3), dtype=jnp.float32).astype(jnp.bfloat16)
    mask3 = (jax.random.uniform(k_m3, (B3, N3)) > 0.3).astype(jnp.int32)
    mask3 = mask3.at[:, 0].set(1)

    out3 = jax.block_until_ready(softmax_log_prob_amps(x3, mask3))
    assert out3.dtype == jnp.bfloat16
    ref3 = _reference(x3, mask3)
    valid3 = mask3 > 0
    diff3 = jnp.max(jnp.abs(jnp.where(valid3, out3.astype(jnp.float32) - ref3, 0.0)))
    assert diff3 < 5e-2, f"mismatch (test 3, bf16): {diff3}"
    assert bool(jnp.all(jnp.where(valid3, True, jnp.isneginf(out3)))), \
        "masked entries not -inf (bf16)"

    print("KERNEL_OK")
</pallas_src>

<mosaic_0001>
module attributes {stable_mosaic.version = 11 : i64} {
  func.func @_softmax_logprob_amps_kernel(%arg0: i32, %arg1: memref<8x128xf32, #tpu.memory_space<vmem>>, %arg2: memref<8x128xi32, #tpu.memory_space<vmem>>, %arg3: memref<8x128xf32, #tpu.memory_space<vmem>>) attributes {dimension_semantics = [#tpu.dimension_semantics<parallel>], iteration_bounds = array<i64: 1>, scalar_prefetch = 0 : i64, scratch_operands = 0 : i64, tpu.core_type = #tpu.core_type<tc>, window_params = [{transform_indices = @transform_0, window_bounds = array<i64: 8, 128>}, {transform_indices = @transform_1, window_bounds = array<i64: 8, 128>}, {transform_indices = @transform_2, window_bounds = array<i64: 8, 128>}]} {
    %c0 = arith.constant 0 : index
    %c0_0 = arith.constant 0 : index
    %0 = vector.load %arg1[%c0, %c0_0] : memref<8x128xf32, #tpu.memory_space<vmem>>, vector<8x128xf32>
    %c0_1 = arith.constant 0 : index
    %c0_2 = arith.constant 0 : index
    %1 = vector.load %arg2[%c0_1, %c0_2] : memref<8x128xi32, #tpu.memory_space<vmem>>, vector<8x128xi32>
    %c0_i32 = arith.constant 0 : i32
    %2 = vector.broadcast %c0_i32 : i32 to vector<8x128xi32>
    %3 = arith.cmpi ne, %1, %2 : vector<8x128xi32>
    %cst = arith.constant 0xFF800000 : f32
    %4 = vector.broadcast %cst : f32 to vector<8x128xf32>
    %5 = arith.select %3, %0, %4 : vector<8x128xi1>, vector<8x128xf32>
    %cst_3 = arith.constant dense<0xFF800000> : vector<8xf32>
    %6 = vector.multi_reduction <maximumf>, %5, %cst_3 [1] : vector<8x128xf32> to vector<8xf32>
    %7 = vector.shape_cast %6 : vector<8xf32> to vector<8x1xf32>
    %cst_4 = arith.constant -3.40282347E+38 : f32
    %8 = vector.broadcast %cst_4 : f32 to vector<8x1xf32>
    %9 = arith.maximumf %7, %8 : vector<8x1xf32>
    %10 = vector.broadcast %9 : vector<8x1xf32> to vector<8x128xf32>
    %11 = arith.subf %5, %10 : vector<8x128xf32>
    %cst_5 = arith.constant 2.000000e+00 : f32
    %12 = vector.broadcast %cst_5 : f32 to vector<8x128xf32>
    %13 = arith.mulf %12, %11 : vector<8x128xf32>
    %14 = math.exp %13 : vector<8x128xf32>
    %cst_6 = arith.constant dense<0.000000e+00> : vector<8xf32>
    %15 = vector.multi_reduction <add>, %14, %cst_6 [1] : vector<8x128xf32> to vector<8xf32>
    %16 = vector.shape_cast %15 : vector<8xf32> to vector<8x1xf32>
    %cst_7 = arith.constant 1.17549435E-38 : f32
    %17 = vector.broadcast %cst_7 : f32 to vector<8x1xf32>
    %18 = arith.maximumf %16, %17 : vector<8x1xf32>
    %19 = math.log %18 : vector<8x1xf32>
    %cst_8 = arith.constant 5.000000e-01 : f32
    %20 = vector.broadcast %cst_8 : f32 to vector<8x1xf32>
    %21 = arith.mulf %20, %19 : vector<8x1xf32>
    %22 = arith.addf %9, %21 : vector<8x1xf32>
    %23 = vector.broadcast %22 : vector<8x1xf32> to vector<8x128xf32>
    %24 = arith.subf %5, %23 : vector<8x128xf32>
    %c0_9 = arith.constant 0 : index
    %c0_10 = arith.constant 0 : index
    %25 = vector.load %arg3[%c0_9, %c0_10] : memref<8x128xf32, #tpu.memory_space<vmem>>, vector<8x128xf32>
    tpu.vector_store %arg3[%c0_9, %c0_10], %24 {strides = array<i32>} : memref<8x128xf32, #tpu.memory_space<vmem>>, vector<8x128xf32>,
    return
  }
  func.func @transform_0(%arg0: i32) -> (i32, i32) {
    %c0_i32 = arith.constant 0 : i32
    %c0_i32_0 = arith.constant 0 : i32
    return %arg0, %c0_i32 : i32, i32
  }
  func.func @transform_1(%arg0: i32) -> (i32, i32) {
    %c0_i32 = arith.constant 0 : i32
    %c0_i32_0 = arith.constant 0 : i32
    return %arg0, %c0_i32 : i32, i32
  }
  func.func @transform_2(%arg0: i32) -> (i32, i32) {
    %c0_i32 = arith.constant 0 : i32
    %c0_i32_0 = arith.constant 0 : i32
    return %arg0, %c0_i32 : i32, i32
  }
}

</mosaic_0001>

<llo_original>
// kernel: tpu_custom_call.1
$region0: #{tpu_custom_call.1}
  #allocation0 [shape = 'u32[]', space=smem, size = 0x4, offset = 0x4, fixed_abs, tag = 'smem constant byte address 0x4 - core index']
  #allocation1 [shape = 'u32[144,128]{1,0:T(1,128)}', space=vmem, size = 0x12000, scoped, tag = 'internal scratch']
  %s0 = inlined_call_operand.hbm [shape: f32[8,128], index: 0, kind: input, shape index: {}]
  %s1 = inlined_call_operand.hbm [shape: s32[8,128], index: 1, kind: input, shape index: {}]
  %s2 = inlined_call_operand.hbm [shape: f32[8,128], index: 2, kind: output, shape index: {}]
  %s3 = sld [smem:[#allocation0]]
  $region26: #{tpu_custom_call.1} parent=0
    _
  %s5 = ssub.s32 1, %s3
  %s6 = scalar_select 0, %s5, %s3
  $region1: #{tpu_custom_call.1} parent=0
    #allocation2 [shape = 'u8[4096]{0}', space=vmem, size = 0x1000, scoped, tag = 'input window, operand 0, single buffered']
    #allocation3 [shape = 's32[1]{0}', space=sflag, size = 0x4, scoped, tag = 'scoped memory for tpu_custom_call.1']
    #allocation4 [shape = 's32[1]{0}', space=sflag, size = 0x4, scoped, tag = 'scoped memory for tpu_custom_call.1']
    #allocation5 [shape = 'u8[4096]{0}', space=vmem, size = 0x1000, scoped, tag = 'input window, operand 1, single buffered']
    #allocation6 [shape = 's32[1]{0}', space=sflag, size = 0x4, scoped, tag = 'scoped memory for tpu_custom_call.1']
    #allocation7 [shape = 'u8[4096]{0}', space=vmem, size = 0x1000, scoped, tag = 'output window, operand 0, single buffered']
    %7 = vsyncpa [#allocation3], 0
    %8 = vsyncpa [#allocation6], 0
    %9 = vsyncpa [#allocation4], 0
    // Predicated region
    $region2: #{tpu_custom_call.1} parent=1 // pred_check
      _
    $region3: #{tpu_custom_call.1} parent=1 // pred_check_branch
      %11 = sbr.rel (0) target = $region5
    $region4: #{tpu_custom_call.1} parent=1 // pred_region
      %s13 = ssub.s32 128, 128
      %14 = vsyncadd [#allocation3], %s13
      %s16 = sshll.u32 [#allocation2], 4
      %s17 = int_to_ptr.vmem [resolvable:$true] %s16
      %19 = dma.hbm_to_vmem [thread:$0]  %s0, 128, %s17, [#allocation3]
    $region5: #{tpu_custom_call.1} parent=1 // pred_fallthru
      _
    // Predicated region
    $region6: #{tpu_custom_call.1} parent=1 // pred_check
      _
    $region7: #{tpu_custom_call.1} parent=1 // pred_check_branch
      %21 = sbr.rel (0) target = $region9
    $region8: #{tpu_custom_call.1} parent=1 // pred_region
      %s23 = ssub.s32 128, 128
      %24 = vsyncadd [#allocation6], %s23
      %s26 = sshll.u32 [#allocation5], 4
      %s27 = int_to_ptr.vmem [resolvable:$true] %s26
      %29 = dma.hbm_to_vmem [thread:$0]  %s1, 128, %s27, [#allocation6]
    $region9: #{tpu_custom_call.1} parent=1 // pred_fallthru
      _
    // Predicated region
    $region10: #{tpu_custom_call.1} parent=1 // pred_check
      _
    $region11: #{tpu_custom_call.1} parent=1 // pred_check_branch
      %31 = sbr.rel (0) target = $region13
    $region12: #{tpu_custom_call.1} parent=1 // pred_region
      %32 = dma.done [#allocation3], 128
    $region13: #{tpu_custom_call.1} parent=1 // pred_fallthru
      _
    // Predicated region
    $region14: #{tpu_custom_call.1} parent=1 // pred_check
      _
    $region15: #{tpu_custom_call.1} parent=1 // pred_check_branch
      %34 = sbr.rel (0) target = $region17
    $region16: #{tpu_custom_call.1} parent=1 // pred_region
      %35 = dma.done [#allocation6], 128
    $region17: #{tpu_custom_call.1} parent=1 // pred_fallthru
      _
    %v36 = vld [vmem:[#allocation2] sm:$0xff]
    %v37 = vld [vmem:[#allocation5] sm:$0xff]
    %vm38 = vcmp.ne.s32.totalorder %v37, 0
    %v39 = vsel %vm38, %v36, -inf
    %40 = vmax.xlane.f32.xlu0 %v39
    %v41 = vpop.xlane.xlu0 %40
    %v42 = vmax.f32 %v41, -3.4028235e+38
    %v43 = vsub.f32 %v39, %v42
    %v44 = vmul.f32 %v43, 2.0
    %v45 = vmul.f32 %v44, 1.442695
    %v46 = vpow.pop %v45
    %47 = vadd.xlane.f32.xlu0 %v46
    %v48 = vpop.xlane.xlu0 %47
    %v49 = vmax.f32 %v48, 1.1754944e-38
    %v50 = vlog2.pop %v49
    %v51 = vmul.f32 %v50, 0.6931472
    %v52 = vmul.f32 %v51, 0.5
    %v53 = vadd.f32 %v42, %v52
    %v54 = vsub.f32 %v39, %v53
    %55 = vst [vmem:[#allocation7] sm:$0xff] %v54
    // Predicated region
    $region18: #{tpu_custom_call.1} parent=1 // pred_check
      _
    $region19: #{tpu_custom_call.1} parent=1 // pred_check_branch
      %57 = sbr.rel (0) target = $region21
    $region20: #{tpu_custom_call.1} parent=1 // pred_region
      %s59 = ssub.s32 128, 128
      %60 = vsyncadd [#allocation4], %s59
      %s62 = sshll.u32 [#allocation7], 4
      %s63 = int_to_ptr.vmem [resolvable:$true] %s62
      %65 = dma.vmem_to_hbm [thread:$0]  %s63, 128, %s2, [#allocation4]
    $region21: #{tpu_custom_call.1} parent=1 // pred_fallthru
      _
    // Predicated region
    $region22: #{tpu_custom_call.1} parent=1 // pred_check
      _
    $region23: #{tpu_custom_call.1} parent=1 // pred_check_branch
      %67 = sbr.rel (0) target = $region25
    $region24: #{tpu_custom_call.1} parent=1 // pred_region
      %68 = dma.done [#allocation4], 128
    $region25: #{tpu_custom_call.1} parent=1 // pred_fallthru
      _
    %69 = vsyncpa [#allocation3], 1
    %70 = vsyncpa [#allocation6], 1
    %71 = vsyncpa [#allocation4], 1

</llo_original>
